<compile_context>
chip_gen: v7x
topology: tpu7x:2x2x1
jax: 0.10.0
libtpu: 0.0.40
codegen_flags: <defaults>
</compile_context>

<pallas_src>
import functools
import math

import jax
import jax.numpy as jnp
from jax.experimental import pallas as pl
from jax.experimental.pallas import tpu as pltpu

_LANE = 128


# ---------------------------------------------------------------------------
# Hardware / tiling helpers
# ---------------------------------------------------------------------------

@functools.lru_cache(maxsize=None)
def _vmem_capacity_bytes():
    try:
        info = pltpu.get_tpu_info()
        cap = getattr(info, "vmem_capacity_bytes", None)
        if cap:
            return int(cap)
    except Exception:
        pass
    return 64 << 20  # conservative default (v7x per-TensorCore VMEM)


@functools.lru_cache(maxsize=None)
def _vmem_limit_bytes():
    # ~48 MiB on v7x (64 MiB physical), ~96-100 MiB on v5e/v6e (128 MiB physical).
    return int(min(_vmem_capacity_bytes() * 3 // 4, 100 << 20))


def _nbytes(shape, dtype):
    return math.prod(shape) * jnp.dtype(dtype).itemsize


def _sublane_align(*dtypes):
    """Packed sublane multiple: 8 for f32, 16 for bf16/f16, 32 for 8-bit."""
    a = 8
    for dt in dtypes:
        if dt is None:
            continue
        a = max(a, 32 // max(jnp.dtype(dt).itemsize, 1))
    return a


def _pick_sub_tile(dim, preferred, align):
    """Sublane-side tile: full dim (always legal) or aligned multiple <= preferred."""
    if dim <= preferred:
        return dim
    return max(align, (preferred // align) * align)


def _pick_lane_tile(dim, preferred):
    """Lane-side tile: full dim (always legal) or multiple of 128 <= preferred."""
    if dim <= preferred:
        return dim
    return max(_LANE, (preferred // _LANE) * _LANE)


def _pick_k_tile(d, preferred=512):
    """Contraction tile.  Must be a multiple of 128 that EXACTLY divides d (so
    the fp32 accumulator never sees padded garbage); otherwise the full dim."""
    if d > preferred and d % _LANE == 0:
        t = (preferred // _LANE) * _LANE
        while t >= _LANE:
            if d % t == 0:
                return t
            t -= _LANE
    return d


def _split_for_megacore(dim, tile, align, lane):
    """If a dim collapsed to a single block, split it so >=2 grid blocks exist
    along a parallel axis (keeps both v7x TensorCores busy)."""
    if tile != dim:
        return tile
    if lane:
        if dim >= 2 * _LANE:
            return max(_LANE, ((dim // 2) // _LANE) * _LANE)
    elif dim >= 2 * align:
        half = -(-dim // 2)
        return max(align, -(-half // align) * align)
    return tile


# ---------------------------------------------------------------------------
# Pallas kernels
# ---------------------------------------------------------------------------

def _make_kron2_kernel(inter_dtype, has_bias):
    """Fused 2-factor contraction.  t = W0_tile @ X is cached in an fp32 VMEM
    scratch and computed only when the output-column index j == 0; the second
    GEMM consumes W1 untransposed (trans_b dot_general)."""

    def kernel(*refs):
        if has_bias:
            w0_ref, x_ref, w1_ref, b_ref, o_ref, t_ref = refs
        else:
            w0_ref, x_ref, w1_ref, o_ref, t_ref = refs
            b_ref = None

        @pl.when(pl.program_id(1) == 0)
        def _():
            t_ref[...] = jnp.dot(w0_ref[...], x_ref[...],
                                 preferred_element_type=jnp.float32)

        # Per-step downcast to the promoted input dtype (matches the einsum
        # reference); a no-op when everything is fp32.
        t = t_ref[...].astype(inter_dtype)
        y = jax.lax.dot_general(
            t, w1_ref[...],
            dimension_numbers=(((1,), (1,)), ((), ())),
            preferred_element_type=jnp.float32)          # (tm, tn)
        if b_ref is not None:
            y = y + b_ref[...].astype(jnp.float32)
        o_ref[...] = y.astype(o_ref.dtype)

    return kernel


def _make_modek_kernel(has_bias):
    """One K-tiled mode-k product.  The partial product is produced directly in
    (tr, to) layout (contract x dim0 with w dim1) -- no fp32 result transpose --
    and accumulated in an fp32 VMEM scratch across the K grid axis."""

    def kernel(*refs):
        if has_bias:
            x_ref, w_ref, b_ref, o_ref, acc_ref = refs
        else:
            x_ref, w_ref, o_ref, acc_ref = refs
            b_ref = None

        k = pl.program_id(2)

        @pl.when(k == 0)
        def _():
            acc_ref[...] = jnp.zeros_like(acc_ref)

        acc_ref[...] += jax.lax.dot_general(
            x_ref[...], w_ref[...],
            dimension_numbers=(((0,), (1,)), ((), ())),
            preferred_element_type=jnp.float32)          # (tr, to)

        @pl.when(k == pl.num_programs(2) - 1)
        def _():
            y = acc_ref[...]
            if b_ref is not None:
                y = y + b_ref[...].astype(jnp.float32)
            o_ref[...] = y.astype(o_ref.dtype)

    return kernel


# ---------------------------------------------------------------------------
# Wrappers
# ---------------------------------------------------------------------------

def _kron2_forward(x, w0, w1, bias, out_dtype):
    """Single fused pallas_call for the canonical 2-factor case.  Returns None
    if the resident X slab would not fit the VMEM budget (caller falls back to
    the K-tiled mode-product chain)."""
    o0, k0 = w0.shape
    o1, k1 = w1.shape
    inter_dtype = jnp.result_type(x.dtype, w0.dtype)

    align_m = _sublane_align(w0.dtype, out_dtype,
                             None if bias is None else bias.dtype)
    tm = _pick_sub_tile(o0, 256, align_m)
    tn = _pick_lane_tile(o1, 256)

    if pl.cdiv(o0, tm) == 1 and pl.cdiv(o1, tn) == 1:
        tn = _split_for_megacore(o1, tn, _LANE, lane=True)
        if tn == o1:
            tm = _split_for_megacore(o0, tm, align_m, lane=False)

    def footprint(tm_, tn_):
        f = (2 * _nbytes((tm_, k0), w0.dtype)
             + 2 * _nbytes((k0, k1), x.dtype)
             + 2 * _nbytes((tn_, k1), w1.dtype)
             + 2 * _nbytes((tm_, tn_), out_dtype)
             + _nbytes((tm_, k1), jnp.float32))
        if bias is not None:
            f += 2 * _nbytes((tm_, tn_), bias.dtype)
        return f

    budget = int(_vmem_limit_bytes() * 0.6)
    while footprint(tm, tn) > budget and (tm > align_m or tn > _LANE):
        if tm >= tn and tm > align_m:
            tm = max(align_m, (tm // 2 // align_m) * align_m)
        elif tn > _LANE:
            tn = max(_LANE, (tn // 2 // _LANE) * _LANE)
        else:
            break
    if footprint(tm, tn) > budget:
        return None  # X itself too big for the fused path

    grid = (pl.cdiv(o0, tm), pl.cdiv(o1, tn))

    in_specs = [
        pl.BlockSpec((tm, k0), lambda i, j: (i, 0)),   # W0 row tile (full K)
        pl.BlockSpec((k0, k1), lambda i, j: (0, 0)),   # X resident across grid
        pl.BlockSpec((tn, k1), lambda i, j: (j, 0)),   # W1 row tile, untransposed
    ]
    args = [w0, x, w1]
    if bias is not None:
        in_specs.append(pl.BlockSpec((tm, tn), lambda i, j: (i, j)))
        args.append(bias)

    kernel = _make_kron2_kernel(inter_dtype, bias is not None)

    flops = int(2 * o0 * k0 * k1 + 2 * o0 * o1 * k1)
    bytes_accessed = (_nbytes((o0, k0), w0.dtype) + _nbytes((k0, k1), x.dtype)
                      + _nbytes((o1, k1), w1.dtype) + _nbytes((o0, o1), out_dtype))
    if bias is not None:
        bytes_accessed += _nbytes((o0, o1), bias.dtype)

    return pl.pallas_call(
        kernel,
        out_shape=jax.ShapeDtypeStruct((o0, o1), out_dtype),
        grid=grid,
        in_specs=in_specs,
        out_specs=pl.BlockSpec((tm, tn), lambda i, j: (i, j)),
        scratch_shapes=[pltpu.VMEM((tm, k1), jnp.float32)],
        compiler_params=pltpu.CompilerParams(
            # Axis 1 must be "arbitrary": the cached t scratch is filled at j==0
            # and reused across the whole j range.
            dimension_semantics=("parallel", "arbitrary"),
            vmem_limit_bytes=_vmem_limit_bytes()),
        cost_estimate=pl.CostEstimate(flops=flops, transcendentals=0,
                                      bytes_accessed=int(bytes_accessed)),
    )(*args)


def _mode_product(x2d, w, bias2d, out_dtype):
    """One K-tiled mode-k product: output[r, o] = sum_j x2d[j, r] * w[o, j],
    bias optionally fused (last factor only)."""
    d, r = x2d.shape
    o = w.shape[0]

    tk = _pick_k_tile(d, 512)
    tr = _pick_lane_tile(r, 512)
    to = _pick_lane_tile(o, 256)

    if pl.cdiv(r, tr) == 1 and pl.cdiv(o, to) == 1:
        tr = _split_for_megacore(r, tr, _LANE, lane=True)
        if tr == r:
            to = _split_for_megacore(o, to, _LANE, lane=True)

    def footprint(tk_, tr_, to_):
        f = (2 * _nbytes((tk_, tr_), x2d.dtype)
             + 2 * _nbytes((to_, tk_), w.dtype)
             + 2 * _nbytes((tr_, to_), out_dtype)
             + _nbytes((tr_, to_), jnp.float32))
        if bias2d is not None:
            f += 2 * _nbytes((tr_, to_), bias2d.dtype)
        return f

    budget = int(_vmem_limit_bytes() * 0.6)
    while footprint(tk, tr, to) > budget and (tr > _LANE or to > _LANE):
        if tr >= to and tr > _LANE:
            tr = max(_LANE, (tr // 2 // _LANE) * _LANE)
        elif to > _LANE:
            to = max(_LANE, (to // 2 // _LANE) * _LANE)
        else:
            break

    grid = (pl.cdiv(r, tr), pl.cdiv(o, to), pl.cdiv(d, tk))

    in_specs = [
        pl.BlockSpec((tk, tr), lambda i, j, k: (k, i)),   # X2d column tile
        pl.BlockSpec((to, tk), lambda i, j, k: (j, k)),   # W row tile
    ]
    args = [x2d, w]
    if bias2d is not None:
        in_specs.append(pl.BlockSpec((tr, to), lambda i, j, k: (i, j)))
        args.append(bias2d)

    kernel = _make_modek_kernel(bias2d is not None)

    flops = int(2 * r * o * d)
    bytes_accessed = (_nbytes((d, r), x2d.dtype) + _nbytes((o, d), w.dtype)
                      + _nbytes((r, o), out_dtype))
    if bias2d is not None:
        bytes_accessed += _nbytes((r, o), bias2d.dtype)

    return pl.pallas_call(
        kernel,
        out_shape=jax.ShapeDtypeStruct((r, o), out_dtype),
        grid=grid,
        in_specs=in_specs,
        out_specs=pl.BlockSpec((tr, to), lambda i, j, k: (i, j)),
        scratch_shapes=[pltpu.VMEM((tr, to), jnp.float32)],
        compiler_params=pltpu.CompilerParams(
            dimension_semantics=("parallel", "parallel", "arbitrary"),
            vmem_limit_bytes=_vmem_limit_bytes()),
        cost_estimate=pl.CostEstimate(flops=flops, transcendentals=0,
                                      bytes_accessed=int(bytes_accessed)),
    )(*args)


def kron_linear_forward(x, weights, bias=None):
    """Mirrors KronLinear.forward for an arbitrary number of factors."""
    assert x.ndim == len(weights)
    rank = len(weights)

    dtypes = [x.dtype] + [w.dtype for w in weights]
    if bias is not None:
        dtypes.append(bias.dtype)
    out_dtype = jnp.result_type(*dtypes)

    # Canonical 2-factor case: one fused call (falls back to the general path
    # when the resident X slab would exceed the VMEM budget).
    if rank == 2:
        y = _kron2_forward(x, weights[0], weights[1], bias, out_dtype)
        if y is not None:
            return y

    # General path: cyclic "contracted axis first" layout.  Before processing
    # factor `dim` the tensor axes are (d_dim, d_{dim+1}, ..., d_{rank-1},
    # o_0, ..., o_{dim-1}); each kernel stores its tile in (rest, o) layout so
    # the next factor's axis is leading again.  Only free row-major reshapes
    # happen between calls and the final tensor lands directly in out_size order.
    for dim, w in enumerate(weights):
        rest = x.shape[1:]
        r = max(1, math.prod(rest))
        x2d = x.reshape(x.shape[0], r)
        b2d = None
        if dim == rank - 1 and bias is not None:
            b2d = bias.reshape(r, w.shape[0])   # final layout == out_size
        y2d = _mode_product(x2d, w, b2d, out_dtype)
        x = y2d.reshape(rest + (w.shape[0],))
    return x


# ---------------------------------------------------------------------------
# Deterministic parameter init (matches nn.init.kaiming_uniform_(a=sqrt(5)):
# uniform(-1/sqrt(fan_in), 1/sqrt(fan_in)); bias -> zeros)
# ---------------------------------------------------------------------------

def init_kron_linear(key, in_size, out_size, bias=True, dtype=jnp.float32):
    weights = []
    for out_f, in_f in zip(out_size, in_size):
        key, sub = jax.random.split(key)
        bound = 1.0 / math.sqrt(in_f)
        weights.append(
            jax.random.uniform(sub, (out_f, in_f), dtype=dtype,
                               minval=-bound, maxval=bound))
    b = jnp.zeros(tuple(out_size), dtype=dtype) if bias else None
    return weights, b


# ---------------------------------------------------------------------------
# Pure-JAX reference (mirrors the torch.einsum chain) for correctness checks.
# ---------------------------------------------------------------------------

def _format_einsum_str(dim, rank):
    letters = "ABCDEFGHIJKLMNOPQRSTUVWXYZ"
    prefix = letters[:dim]
    suffix = letters[dim + 1:rank]
    return f"ij,{prefix}j{suffix}->{prefix}i{suffix}"


def kron_linear_reference(x, weights, bias=None):
    rank = len(weights)
    for dim, w in enumerate(weights):
        x = jnp.einsum(_format_einsum_str(dim, rank), w, x,
                       preferred_element_type=jnp.float32).astype(x.dtype)
    return x + bias if bias is not None else x


# ---------------------------------------------------------------------------

if __name__ == "__main__":
    key = jax.random.PRNGKey(0)

    def check(x, weights, bias, out_size, tol=2e-3):
        y = jax.block_until_ready(jax.jit(kron_linear_forward)(x, weights, bias))
        y_ref = kron_linear_reference(x, weights, bias)
        assert y.shape == tuple(out_size), (y.shape, out_size)
        assert jnp.allclose(y, y_ref, rtol=tol, atol=tol), \
            float(jnp.max(jnp.abs(y - y_ref)))

    # ---- Rank-2 canonical case (fused kernel, ragged non-128-divisible o1) ----
    in_size = (32, 64)
    out_size = (24, 320)
    key, kx, kp, kb = jax.random.split(key, 4)
    x = jax.random.normal(kx, in_size, dtype=jnp.float32)
    weights, bias = init_kron_linear(kp, in_size, out_size, bias=True)
    # Bias is zero-init per the module; perturb it so the fused add is exercised.
    bias = bias + 0.1 * jax.random.normal(kb, out_size, dtype=jnp.float32)
    check(x, weights, bias, out_size)

    # ---- Rank-2, no bias ----
    check(x, weights, None, out_size)

    # ---- Rank-3 (transpose-free mode-product chain), with bias ----
    in_size3 = (8, 16, 32)
    out_size3 = (8, 16, 128)
    key, kx3, kp3, kb3 = jax.random.split(key, 4)
    x3 = jax.random.normal(kx3, in_size3, dtype=jnp.float32)
    weights3, bias3 = init_kron_linear(kp3, in_size3, out_size3, bias=True)
    bias3 = bias3 + 0.1 * jax.random.normal(kb3, out_size3, dtype=jnp.float32)
    check(x3, weights3, bias3, out_size3)

    # ---- Rank-3 with a large contraction dim (exercises the K-tiled fp32
    #      accumulator: d=1024 -> two 512-wide K blocks) ----
    in_size3b = (8, 16, 1024)
    out_size3b = (8, 16, 128)
    key, kxb, kpb, kbb = jax.random.split(key, 4)
    x3b = jax.random.normal(kxb, in_size3b, dtype=jnp.float32)
    weights3b, bias3b = init_kron_linear(kpb, in_size3b, out_size3b, bias=True)
    bias3b = bias3b + 0.1 * jax.random.normal(kbb, out_size3b, dtype=jnp.float32)
    check(x3b, weights3b, bias3b, out_size3b)

    # ---- Rank-4 (per review: validates the fused-bias reshape on deeper ranks) ----
    in_size4 = (4, 8, 8, 16)
    out_size4 = (4, 8, 8, 32)
    key, kx4, kp4, kb4 = jax.random.split(key, 4)
    x4 = jax.random.normal(kx4, in_size4, dtype=jnp.float32)
    weights4, bias4 = init_kron_linear(kp4, in_size4, out_size4, bias=True)
    bias4 = bias4 + 0.1 * jax.random.normal(kb4, out_size4, dtype=jnp.float32)
    check(x4, weights4, bias4, out_size4)

    print("KERNEL_OK")
</pallas_src>

<mosaic_0001>
module attributes {stable_mosaic.version = 11 : i64} {
  func.func @kernel(%arg0: i32, %arg1: i32, %arg2: memref<24x32xf32, #tpu.memory_space<vmem>>, %arg3: memref<32x64xf32, #tpu.memory_space<vmem>>, %arg4: memref<256x64xf32, #tpu.memory_space<vmem>>, %arg5: memref<24x256xf32, #tpu.memory_space<vmem>>, %arg6: memref<24x256xf32, #tpu.memory_space<vmem>>, %arg7: memref<24x64xf32, #tpu.memory_space<vmem>>) attributes {dimension_semantics = [#tpu.dimension_semantics<parallel>, #tpu.dimension_semantics<arbitrary>], iteration_bounds = array<i64: 1, 2>, scalar_prefetch = 0 : i64, scratch_operands = 1 : i64, tpu.core_type = #tpu.core_type<tc>, window_params = [{transform_indices = @transform_0, window_bounds = array<i64: 24, 32>}, {pipeline_mode = #tpu.pipeline_mode<synchronous>, transform_indices = @transform_1, window_bounds = array<i64: 32, 64>}, {transform_indices = @transform_2, window_bounds = array<i64: 256, 64>}, {transform_indices = @transform_3, window_bounds = array<i64: 24, 256>}, {transform_indices = @transform_4, window_bounds = array<i64: 24, 256>}]} {
    %c0_i32 = arith.constant 0 : i32
    %0 = arith.cmpi eq, %arg1, %c0_i32 : i32
    %1 = arith.extui %0 : i1 to i32
    %c0_i32_0 = arith.constant 0 : i32
    %2 = arith.cmpi ne, %1, %c0_i32_0 : i32
    scf.if %2 {
      %c0_8 = arith.constant 0 : index
      %c0_9 = arith.constant 0 : index
      %9 = vector.load %arg2[%c0_8, %c0_9] : memref<24x32xf32, #tpu.memory_space<vmem>>, vector<24x32xf32>
      %c0_10 = arith.constant 0 : index
      %c0_11 = arith.constant 0 : index
      %10 = vector.load %arg3[%c0_10, %c0_11] : memref<32x64xf32, #tpu.memory_space<vmem>>, vector<32x64xf32>
      %cst_12 = arith.constant dense<0.000000e+00> : vector<24x64xf32>
      %11 = tpu.matmul %9, %10, %cst_12 {dimension_numbers = #tpu.dot_dimension_numbers<[1], [0], [0], [1], [0, 0, 1, 1], [], []>} : vector<24x32xf32>, vector<32x64xf32>, vector<24x64xf32> -> vector<24x64xf32>
      %c0_13 = arith.constant 0 : index
      %c0_14 = arith.constant 0 : index
      %12 = vector.load %arg7[%c0_13, %c0_14] : memref<24x64xf32, #tpu.memory_space<vmem>>, vector<24x64xf32>
      tpu.vector_store %arg7[%c0_13, %c0_14], %11 {strides = array<i32>} : memref<24x64xf32, #tpu.memory_space<vmem>>, vector<24x64xf32>,
    } else {
    }
    %c0 = arith.constant 0 : index
    %c0_1 = arith.constant 0 : index
    %3 = vector.load %arg7[%c0, %c0_1] : memref<24x64xf32, #tpu.memory_space<vmem>>, vector<24x64xf32>
    %c0_2 = arith.constant 0 : index
    %c0_3 = arith.constant 0 : index
    %4 = vector.load %arg4[%c0_2, %c0_3] : memref<256x64xf32, #tpu.memory_space<vmem>>, vector<256x64xf32>
    %cst = arith.constant dense<0.000000e+00> : vector<24x256xf32>
    %5 = tpu.matmul %3, %4, %cst {dimension_numbers = #tpu.dot_dimension_numbers<[1], [1], [0], [0], [0, 0, 1, 0], [], []>} : vector<24x64xf32>, vector<256x64xf32>, vector<24x256xf32> -> vector<24x256xf32>
    %c0_4 = arith.constant 0 : index
    %c0_5 = arith.constant 0 : index
    %6 = vector.load %arg5[%c0_4, %c0_5] : memref<24x256xf32, #tpu.memory_space<vmem>>, vector<24x256xf32>
    %7 = arith.addf %5, %6 : vector<24x256xf32>
    %c0_6 = arith.constant 0 : index
    %c0_7 = arith.constant 0 : index
    %8 = vector.load %arg6[%c0_6, %c0_7] : memref<24x256xf32, #tpu.memory_space<vmem>>, vector<24x256xf32>
    tpu.vector_store %arg6[%c0_6, %c0_7], %7 {strides = array<i32>} : memref<24x256xf32, #tpu.memory_space<vmem>>, vector<24x256xf32>,
    return
  }
  func.func @transform_0(%arg0: i32, %arg1: i32) -> (i32, i32) {
    %c0_i32 = arith.constant 0 : i32
    %c0_i32_0 = arith.constant 0 : i32
    return %arg0, %c0_i32 : i32, i32
  }
  func.func @transform_1(%arg0: i32, %arg1: i32) -> (i32, i32) {
    %c0_i32 = arith.constant 0 : i32
    %c0_i32_0 = arith.constant 0 : i32
    %c0_i32_1 = arith.constant 0 : i32
    return %c0_i32, %c0_i32_0 : i32, i32
  }
  func.func @transform_2(%arg0: i32, %arg1: i32) -> (i32, i32) {
    %c0_i32 = arith.constant 0 : i32
    %c0_i32_0 = arith.constant 0 : i32
    return %arg1, %c0_i32 : i32, i32
  }
  func.func @transform_3(%arg0: i32, %arg1: i32) -> (i32, i32) {
    %c0_i32 = arith.constant 0 : i32
    return %arg0, %arg1 : i32, i32
  }
  func.func @transform_4(%arg0: i32, %arg1: i32) -> (i32, i32) {
    %c0_i32 = arith.constant 0 : i32
    return %arg0, %arg1 : i32, i32
  }
}

</mosaic_0001>

<llo_original>
// kernel: kron_linear_forward.1
$region0: #{kron_linear_forward.1}
  #allocation0 [shape = 'u32[]', space=smem, size = 0x4, offset = 0x4, fixed_abs, tag = 'smem constant byte address 0x4 - core index']
  #allocation1 [shape = 'u32[144,128]{1,0:T(1,128)}', space=vmem, size = 0x12000, scoped, tag = 'internal scratch']
  #allocation2 [shape = 'f32[24,64]{1,0:T(8,128)}', space=vmem, size = 0x3000, scoped, tag = 'scratch operand']
  %s0 = inlined_call_operand.vmem [shape: f32[24,32], index: 0, kind: input, shape index: {}]
  %s1 = inlined_call_operand.vmem [shape: f32[32,64], index: 1, kind: input, shape index: {}]
  %s2 = inlined_call_operand.vmem [shape: f32[320,64], index: 2, kind: input, shape index: {}]
  %s3 = inlined_call_operand.vmem [shape: f32[24,320], index: 3, kind: input, shape index: {}]
  %s4 = inlined_call_operand.hbm [shape: f32[24,320], index: 4, kind: output, shape index: {}]
  %s5 = sld [smem:[#allocation0]]
  $region119: #{kron_linear_forward.1} parent=0
    _
  %s7 = ssub.s32 1, %s5
  %s8 = scalar_select 0, %s7, %s5
  $region1: #{kron_linear_forward.1} parent=0
    #allocation3 [shape = 'u8[49152]{0}', space=vmem, size = 0xc000, scoped, tag = 'input window, operand 3']
    #allocation4 [shape = 'u8[49152]{0}', space=vmem, size = 0xc000, scoped, tag = 'output window, operand 0']
    #allocation5 [shape = 's32[2]{0}', space=sflag, size = 0x8, scoped, tag = 'scoped memory for kron_linear_forward.1']
    %9 = vsyncpa [#allocation5], 0
    %s10 = scalar_lea.sflag [#allocation5], 1
    %11 = vsyncpa %s10, 0
    loop: start=0, step=1, limit=4
    $region2: #{kron_linear_forward.1} parent=1 // loop_pre_header
      _
    $region3: #{kron_linear_forward.1} parent=1 // loop_header
      %s13 = sphi 0, %s17
      %p14 = scmp.ge.s32.totalorder %s13, 4
      %s20 = sphi 0, %s32
      %s21 = sphi 0, %s28
      %s22 = sphi 0, %s20
      %s23 = sphi 0, %s21
      %s24 = sphi 0, %s22
      %s25 = sphi 0, %s23
      %s35 = sphi 0, %s37
      %s38 = sphi 0, %s35
      %s39 = sphi 0, %s38
      %s55 = sphi 0, %s39
      %s59 = sphi 0, %s59
      %s61 = sphi 0, %s59
      %s62 = sphi 0, %s61
      %s76 = sphi 0, %s62
      %s82 = sphi 0, %s84
      %s85 = sphi 0, %s82
      %s86 = sphi 0, %s85
      %s102 = sphi 0, %s86
      %s110 = sphi 0, %s112
      %s113 = sphi 0, %s110
      %s114 = sphi 0, %s113
      %s130 = sphi 0, %s114
      %s138 = sphi 0, %s140
      %s141 = sphi 0, %s138
      %s142 = sphi 0, %s141
      %s158 = sphi 0, %s142
    $region4: #{kron_linear_forward.1} parent=1 // loop_header_branch
      %16 = sbr.rel (%p14) target = $region8
    $region5: #{kron_linear_forward.1} parent=1 // loop_body
      %s18 = ssub.s32 %s13, 1
      %s19 = ssub.s32 %s13, 2
      %s26 = sadd.s32 1, %s21
      %p27 = scmp.ge.s32.totalorder %s26, 2
      %s28 = scalar_select %p27, 0, %s26
      %s29 = sadd.s32 1, %s20
      %s30 = scalar_select %p27, %s29, %s20
      %p31 = scmp.ge.s32.totalorder %s30, 1
      %s32 = scalar_select %p31, 0, %s30
      %s33 = ssub.s32 %s20, %s32
      %p34 = scmp.eq.s32.totalorder %s33, 0
      %s36 = sadd.s32 %s35, 1
      %s37 = scalar_select %p34, %s35, %s36
      %p40 = pneg %p34
      %p41 = scmp.eq.s32.totalorder %s13, 1
      %p42 = por %p40, %p41
      %p43 = scmp.ne.s32.totalorder %s35, %s38
      %p44 = scmp.eq.s32.totalorder %s13, 0
      %p45 = por %p43, %p44
      %p46 = scmp.ne.s32.totalorder %s35, %s38
      %p47 = scmp.eq.s32.totalorder %s18, 1
      %p48 = por %p46, %p47
      %p49 = scmp.ne.s32.totalorder %s38, %s39
      %p50 = scmp.eq.s32.totalorder %s18, 0
      %p51 = por %p49, %p50
      %p52 = scmp.ne.s32.totalorder %s38, %s39
      %p53 = scmp.eq.s32.totalorder %s19, 1
      %p54 = por %p52, %p53
      %p56 = scmp.ne.s32.totalorder %s39, %s55
      %p57 = scmp.eq.s32.totalorder %s19, 0
      %p58 = por %p56, %p57
      %s60 = sadd.s32 %s59, 1
      %p63 = scmp.eq.s32.totalorder %s13, 1
      %p64 = scmp.ne.s32.totalorder %s59, %s61
      %p65 = scmp.eq.s32.totalorder %s13, 0
      %p66 = por %p64, %p65
      %p67 = scmp.ne.s32.totalorder %s59, %s61
      %p68 = scmp.eq.s32.totalorder %s18, 1
      %p69 = por %p67, %p68
      %p70 = scmp.ne.s32.totalorder %s61, %s62
      %p71 = scmp.eq.s32.totalorder %s18, 0
      %p72 = por %p70, %p71
      %p73 = scmp.ne.s32.totalorder %s61, %s62
      %p74 = scmp.eq.s32.totalorder %s19, 1
      %p75 = por %p73, %p74
      %p77 = scmp.ne.s32.totalorder %s62, %s76
      %p78 = scmp.eq.s32.totalorder %s19, 0
      %p79 = por %p77, %p78
      %s80 = ssub.s32 %s21, %s28
      %p81 = scmp.eq.s32.totalorder %s80, 0
      %s83 = sadd.s32 %s82, 1
      %s84 = scalar_select %p81, %s82, %s83
      %p87 = pneg %p81
      %p88 = scmp.eq.s32.totalorder %s13, 1
      %p89 = por %p87, %p88
      %p90 = scmp.ne.s32.totalorder %s82, %s85
      %p91 = scmp.eq.s32.totalorder %s13, 0
      %p92 = por %p90, %p91
      %p93 = scmp.ne.s32.totalorder %s82, %s85
      %p94 = scmp.eq.s32.totalorder %s18, 1
      %p95 = por %p93, %p94
      %p96 = scmp.ne.s32.totalorder %s85, %s86
      %p97 = scmp.eq.s32.totalorder %s18, 0
      %p98 = por %p96, %p97
      %p99 = scmp.ne.s32.totalorder %s85, %s86
      %p100 = scmp.eq.s32.totalorder %s19, 1
      %p101 = por %p99, %p100
      %p103 = scmp.ne.s32.totalorder %s86, %s102
      %p104 = scmp.eq.s32.totalorder %s19, 0
      %p105 = por %p103, %p104
      %s106 = ssub.s32 %s20, %s32
      %s107 = ssub.s32 %s21, %s28
      %s108 = sor.u32 %s106, %s107
      %p109 = scmp.eq.s32.totalorder %s108, 0
      %s111 = sadd.s32 %s110, 1
      %s112 = scalar_select %p109, %s110, %s111
      %p115 = pneg %p109
      %p116 = scmp.eq.s32.totalorder %s13, 1
      %p117 = por %p115, %p116
      %p118 = scmp.ne.s32.totalorder %s110, %s113
      %p119 = scmp.eq.s32.totalorder %s13, 0
      %p120 = por %p118, %p119
      %p121 = scmp.ne.s32.totalorder %s110, %s113
      %p122 = scmp.eq.s32.totalorder %s18, 1
      %p123 = por %p121, %p122
      %p124 = scmp.ne.s32.totalorder %s113, %s114
      %p125 = scmp.eq.s32.totalorder %s18, 0
      %p126 = por %p124, %p125
      %p127 = scmp.ne.s32.totalorder %s113, %s114
      %p128 = scmp.eq.s32.totalorder %s19, 1
      %p129 = por %p127, %p128
      %p131 = scmp.ne.s32.totalorder %s114, %s130
      %p132 = scmp.eq.s32.totalorder %s19, 0
      %p133 = por %p131, %p132
      %s134 = ssub.s32 %s20, %s32
      %s135 = ssub.s32 %s21, %s28
      %s136 = sor.u32 %s134, %s135
      %p137 = scmp.eq.s32.totalorder %s136, 0
      %s139 = sadd.s32 %s138, 1
      %s140 = scalar_select %p137, %s138, %s139
      %p143 = pneg %p137
      %p144 = scmp.eq.s32.totalorder %s13, 1
      %p145 = por %p143, %p144
      %p146 = scmp.ne.s32.totalorder %s138, %s141
      %p147 = scmp.eq.s32.totalorder %s13, 0
      %p148 = por %p146, %p147
      %p149 = scmp.ne.s32.totalorder %s138, %s141
      %p150 = scmp.eq.s32.totalorder %s18, 1
      %p151 = por %p149, %p150
      %p152 = scmp.ne.s32.totalorder %s141, %s142
      %p153 = scmp.eq.s32.totalorder %s18, 0
      %p154 = por %p152, %p153
      %p155 = scmp.ne.s32.totalorder %s141, %s142
      %p156 = scmp.eq.s32.totalorder %s19, 1
      %p157 = por %p155, %p156
      %p159 = scmp.ne.s32.totalorder %s142, %s158
      %p160 = scmp.eq.s32.totalorder %s19, 0
      %p161 = por %p159, %p160
      %p162 = scmp.le.s32.totalorder 1, %s13
      %p163 = scmp.lt.s32.totalorder %s13, 3
      %p164 = pnand %p162, %p163
      %p165 = pneg %p164
      // Predicated region
      $region9: #{kron_linear_forward.1} parent=5 // pred_check
        _
      $region10: #{kron_linear_forward.1} parent=5 // pred_check_branch
        %167 = sbr.rel (%p164) target = $region12
      $region11: #{kron_linear_forward.1} parent=5 // pred_region
        %s168 = ssub.s32 %s13, 1
        // Predicated region
        $region13: #{kron_linear_forward.1} parent=11 // pred_check
          %p169 = pneg %p51
        $region14: #{kron_linear_forward.1} parent=11 // pred_check_branch
          %171 = sbr.rel (%p169) target = $region16
        $region15: #{kron_linear_forward.1} parent=11 // pred_region
          %s172 = smul.u32 3, %s22
          %p173 = scmp.lt.s32.totalorder %s172, 2
          %s174 = scalar_select %p173, %s172, 2
          %s175 = smul.addr %s174, 8
          %s176 = scalar_lea.vmem %s0, %s175
          %s177 = smul.u32 3, %s22
        $region16: #{kron_linear_forward.1} parent=11 // pred_fallthru
          _
        // Predicated region
        $region17: #{kron_linear_forward.1} parent=11 // pred_check
          %p178 = pneg %p72
        $region18: #{kron_linear_forward.1} parent=11 // pred_check_branch
          %180 = sbr.rel (%p178) target = $region20
        $region19: #{kron_linear_forward.1} parent=11 // pred_region
          _
        $region20: #{kron_linear_forward.1} parent=11 // pred_fallthru
          _
      $region12: #{kron_linear_forward.1} parent=5 // pred_fallthru
        _
      %p181 = scmp.lt.s32.totalorder %s13, 2
      // Predicated region
      $region21: #{kron_linear_forward.1} parent=5 // pred_check
        %p182 = pneg %p181
      $region22: #{kron_linear_forward.1} parent=5 // pred_check_branch
        %184 = sbr.rel (%p182) target = $region24
      $region23: #{kron_linear_forward.1} parent=5 // pred_region
        // Predicated region
        $region25: #{kron_linear_forward.1} parent=23 // pred_check
          %p185 = pneg %p92
        $region26: #{kron_linear_forward.1} parent=23 // pred_check_branch
          %187 = sbr.rel (%p185) target = $region28
        $region27: #{kron_linear_forward.1} parent=23 // pred_region
          %s188 = smul.u32 32, %s21
          %s189 = ssub.s32 40, %s188
          %p190 = scmp.lt.s32.totalorder %s189, 32
          %s191 = scalar_select %p190, %s189, 32
          %s192 = smul.u32 128, %s191
          %p193 = scmp.lt.s32.totalorder %s188, 39
          %s194 = scalar_select %p193, %s188, 39
          %s195 = smul.addr %s194, 8
          %s196 = scalar_lea.vmem %s2, %s195
          %s197 = smul.u32 32, %s21
          %s198 = ssub.s32 40, %s197
          %p199 = scmp.lt.s32.totalorder %s198, 32
          %s200 = scalar_select %p199, %s198, 32
          %s201 = smul.u32 128, %s200
        $region28: #{kron_linear_forward.1} parent=23 // pred_fallthru
          _
        // Predicated region
        $region29: #{kron_linear_forward.1} parent=23 // pred_check
          %p202 = pneg %p120
        $region30: #{kron_linear_forward.1} parent=23 // pred_check_branch
          %204 = sbr.rel (%p202) target = $region32
        $region31: #{kron_linear_forward.1} parent=23 // pred_region
          %s205 = sand.u32 %s110, 1
          %s206 = sand.u32 %s110, 1
          %s207 = smul.addr %s206, 48
          %s208 = scalar_lea.vmem [#allocation3], %s207
          %s209 = smul.u32 3, %s20
          %s210 = smul.u32 2, %s21
          %s211 = ssub.s32 3, %s210
          %p212 = scmp.lt.s32.totalorder %s211, 2
          %s213 = scalar_select %p212, %s211, 2
          %s214 = smul.u32 384, %s213
          %p215 = scmp.ne.s32.totalorder 0, %s214
          %s216 = smul.addr %s209, 3
          %s217 = sadd.s32 %s210, %s216
          %s218 = smul.addr %s217, 8
          %s219 = scalar_lea.vmem %s3, %s218
          %s220 = smul.u32 %s213, 8
          // Predicated region
          $region33: #{kron_linear_forward.1} parent=31 // pred_check
            %p221 = pneg %p215
          $region34: #{kron_linear_forward.1} parent=31 // pred_check_branch
            %223 = sbr.rel (%p221) target = $region36
          $region35: #{kron_linear_forward.1} parent=31 // pred_region
            %p224 = scmp.lt.u32.totalorder %s220, 8
            %p225 = pneg %p224
            // Predicated region
            $region37: #{kron_linear_forward.1} parent=35 // pred_check
              _
            $region38: #{kron_linear_forward.1} parent=35 // pred_check_branch
              %227 = sbr.rel (%p224) target = $region40
            $region39: #{kron_linear_forward.1} parent=35 // pred_region
              %s246 = sand.u32 %s220, 7
              %p247 = scmp.eq.s32.totalorder %s246, 0
              // Predicated region
              $region52: #{kron_linear_forward.1} parent=39 // pred_check
                %p248 = pneg %p247
              $region53: #{kron_linear_forward.1} parent=39 // pred_check_branch
                %250 = sbr.rel (%p248) target = $region55
              $region54: #{kron_linear_forward.1} parent=39 // pred_region
                %s251 = sshrl.u32 %s220, 3
                %s252 = sdiv.u32.pop %s251, 24
                %s253 = srem.u32.pop %s251, 24
                // While loop
                $region56: #{kron_linear_forward.1} parent=54 // loop_pre_header
                  _
                $region57: #{kron_linear_forward.1} parent=54 // loop_header
                  %s257 = sphi 0, %s259
                  %p258 = scmp.ge.s32.totalorder %s257, %s252
                  %s262 = sphi 0, %s411
                  %s263 = sphi %s219, %s414
                  %s264 = sphi %s208, %s415
                $region58: #{kron_linear_forward.1} parent=54 // loop_header_branch
                  %261 = sbr.rel (%p258) target = $region62
                $region59: #{kron_linear_forward.1} parent=54 // loop_body
                  %v265 = vld [vmem:[%s263] sm:$0xff]
                  %266 = vst [vmem:[%s264] sm:$0xff] %v265
                  %v267 = vld [vmem:[%s263 + $0x8] sm:$0xff]
                  %268 = vst [vmem:[%s264 + $0x8] sm:$0xff] %v267
                  %v269 = vld [vmem:[%s263 + $0x10] sm:$0xff]
                  %270 = vst [vmem:[%s264 + $0x10] sm:$0xff] %v269
                  %v271 = vld [vmem:[%s263 + $0x18] sm:$0xff]
                  %272 = vst [vmem:[%s264 + $0x18] sm:$0xff] %v271
                  %v273 = vld [vmem:[%s263 + $0x20] sm:$0xff]
                  %274 = vst [vmem:[%s264 + $0x20] sm:$0xff] %v273
                  %v275 = vld [vmem:[%s263 + $0x28] sm:$0xff]
                  %276 = vst [vmem:[%s264 + $0x28] sm:$0xff] %v275
                  %v277 = vld [vmem:[%s263 + $0x30] sm:$0xff]
                  %278 = vst [vmem:[%s264 + $0x30] sm:$0xff] %v277
                  %v279 = vld [vmem:[%s263 + $0x38] sm:$0xff]
                  %280 = vst [vmem:[%s264 + $0x38] sm:$0xff] %v279
                  %v281 = vld [vmem:[%s263 + $0x40] sm:$0xff]
                  %282 = vst [vmem:[%s264 + $0x40] sm:$0xff] %v281
                  %v283 = vld [vmem:[%s263 + $0x48] sm:$0xff]
                  %284 = vst [vmem:[%s264 + $0x48] sm:$0xff] %v283
                  %v285 = vld [vmem:[%s263 + $0x50] sm:$0xff]
                  %286 = vst [vmem:[%s264 + $0x50] sm:$0xff] %v285
                  %v287 = vld [vmem:[%s263 + $0x58] sm:$0xff]
                  %288 = vst [vmem:[%s264 + $0x58] sm:$0xff] %v287
                  %v289 = vld [vmem:[%s263 + $0x60] sm:$0xff]
                  %290 = vst [vmem:[%s264 + $0x60] sm:$0xff] %v289
                  %v291 = vld [vmem:[%s263 + $0x68] sm:$0xff]
                  %292 = vst [vmem:[%s264 + $0x68] sm:$0xff] %v291
                  %v293 = vld [vmem:[%s263 + $0x70] sm:$0xff]
                  %294 = vst [vmem:[%s264 + $0x70] sm:$0xff] %v293
                  %v295 = vld [vmem:[%s263 + $0x78] sm:$0xff]
                  %296 = vst [vmem:[%s264 + $0x78] sm:$0xff] %v295
                  %v297 = vld [vmem:[%s263 + $0x80] sm:$0xff]
                  %298 = vst [vmem:[%s264 + $0x80] sm:$0xff] %v297
                  %v299 = vld [vmem:[%s263 + $0x88] sm:$0xff]
                  %300 = vst [vmem:[%s264 + $0x88] sm:$0xff] %v299
                  %v301 = vld [vmem:[%s263 + $0x90] sm:$0xff]
                  %302 = vst [vmem:[%s264 + $0x90] sm:$0xff] %v301
                  %v303 = vld [vmem:[%s263 + $0x98] sm:$0xff]
                  %304 = vst [vmem:[%s264 + $0x98] sm:$0xff] %v303
                  %v305 = vld [vmem:[%s263 + $0xa0] sm:$0xff]
                  %306 = vst [vmem:[%s264 + $0xa0] sm:$0xff] %v305
                  %v307 = vld [vmem:[%s263 + $0xa8] sm:$0xff]
                  %308 = vst [vmem:[%s264 + $0xa8] sm:$0xff] %v307
                  %v309 = vld [vmem:[%s263 + $0xb0] sm:$0xff]
                  %310 = vst [vmem:[%s264 + $0xb0] sm:$0xff] %v309
                  %v311 = vld [vmem:[%s263 + $0xb8] sm:$0xff]
                  %312 = vst [vmem:[%s264 + $0xb8] sm:$0xff] %v311
                  %v313 = vld [vmem:[%s263 + $0x18] sm:$0xff]
                  %314 = vst [vmem:[%s264 + $0x10] sm:$0xff] %v313
                  %v315 = vld [vmem:[%s263 + $0x20] sm:$0xff]
                  %316 = vst [vmem:[%s264 + $0x18] sm:$0xff] %v315
                  %v317 = vld [vmem:[%s263 + $0x28] sm:$0xff]
                  %318 = vst [vmem:[%s264 + $0x20] sm:$0xff] %v317
                  %v319 = vld [vmem:[%s263 + $0x30] sm:$0xff]
                  %320 = vst [vmem:[%s264 + $0x28] sm:$0xff] %v319
                  %v321 = vld [vmem:[%s263 + $0x38] sm:$0xff]
                  %322 = vst [vmem:[%s264 + $0x30] sm:$0xff] %v321
                  %v323 = vld [vmem:[%s263 + $0x40] sm:$0xff]
                  %324 = vst [vmem:[%s264 + $0x38] sm:$0xff] %v323
                  %v325 = vld [vmem:[%s263 + $0x48] sm:$0xff]
                  %326 = vst [vmem:[%s264 + $0x40] sm:$0xff] %v325
                  %v327 = vld [vmem:[%s263 + $0x50] sm:$0xff]
                  %328 = vst [vmem:[%s264 + $0x48] sm:$0xff] %v327
                  %v329 = vld [vmem:[%s263 + $0x58] sm:$0xff]
                  %330 = vst [vmem:[%s264 + $0x50] sm:$0xff] %v329
                  %v331 = vld [vmem:[%s263 + $0x60] sm:$0xff]
                  %332 = vst [vmem:[%s264 + $0x58] sm:$0xff] %v331
                  %v333 = vld [vmem:[%s263 + $0x68] sm:$0xff]
                  %334 = vst [vmem:[%s264 + $0x60] sm:$0xff] %v333
                  %v335 = vld [vmem:[%s263 + $0x70] sm:$0xff]
                  %336 = vst [vmem:[%s264 + $0x68] sm:$0xff] %v335
                  %v337 = vld [vmem:[%s263 + $0x78] sm:$0xff]
                  %338 = vst [vmem:[%s264 + $0x70] sm:$0xff] %v337
                  %v339 = vld [vmem:[%s263 + $0x80] sm:$0xff]
                  %340 = vst [vmem:[%s264 + $0x78] sm:$0xff] %v339
                  %v341 = vld [vmem:[%s263 + $0x88] sm:$0xff]
                  %342 = vst [vmem:[%s264 + $0x80] sm:$0xff] %v341
                  %v343 = vld [vmem:[%s263 + $0x90] sm:$0xff]
                  %344 = vst [vmem:[%s264 + $0x88] sm:$0xff] %v343
                  %v345 = vld [vmem:[%s263 + $0x98] sm:$0xff]
                  %346 = vst [vmem:[%s264 + $0x90] sm:$0xff] %v345
                  %v347 = vld [vmem:[%s263 + $0xa0] sm:$0xff]
                  %348 = vst [vmem:[%s264 + $0x98] sm:$0xff] %v347
                  %v349 = vld [vmem:[%s263 + $0xa8] sm:$0xff]
                  %350 = vst [vmem:[%s264 + $0xa0] sm:$0xff] %v349
                  %v351 = vld [vmem:[%s263 + $0xb0] sm:$0xff]
                  %352 = vst [vmem:[%s264 + $0xa8] sm:$0xff] %v351
                  %v353 = vld [vmem:[%s263 + $0xb8] sm:$0xff]
                  %354 = vst [vmem:[%s264 + $0xb0] sm:$0xff] %v353
                  %v355 = vld [vmem:[%s263 + $0xc0] sm:$0xff]
                  %356 = vst [vmem:[%s264 + $0xb8] sm:$0xff] %v355
                  %v357 = vld [vmem:[%s263 + $0xc8] sm:$0xff]
                  %358 = vst [vmem:[%s264 + $0xc0] sm:$0xff] %v357
                  %v359 = vld [vmem:[%s263 + $0xd0] sm:$0xff]
                  %360 = vst [vmem:[%s264 + $0xc8] sm:$0xff] %v359
                  %v361 = vld [vmem:[%s263 + $0x30] sm:$0xff]
                  %362 = vst [vmem:[%s264 + $0x20] sm:$0xff] %v361
                  %v363 = vld [vmem:[%s263 + $0x38] sm:$0xff]
                  %364 = vst [vmem:[%s264 + $0x28] sm:$0xff] %v363
                  %v365 = vld [vmem:[%s263 + $0x40] sm:$0xff]
                  %366 = vst [vmem:[%s264 + $0x30] sm:$0xff] %v365
                  %v367 = vld [vmem:[%s263 + $0x48] sm:$0xff]
                  %368 = vst [vmem:[%s264 + $0x38] sm:$0xff] %v367
                  %v369 = vld [vmem:[%s263 + $0x50] sm:$0xff]
                  %370 = vst [vmem:[%s264 + $0x40] sm:$0xff] %v369
                  %v371 = vld [vmem:[%s263 + $0x58] sm:$0xff]
                  %372 = vst [vmem:[%s264 + $0x48] sm:$0xff] %v371
                  %v373 = vld [vmem:[%s263 + $0x60] sm:$0xff]
                  %374 = vst [vmem:[%s264 + $0x50] sm:$0xff] %v373
                  %v375 = vld [vmem:[%s263 + $0x68] sm:$0xff]
                  %376 = vst [vmem:[%s264 + $0x58] sm:$0xff] %v375
                  %v377 = vld [vmem:[%s263 + $0x70] sm:$0xff]
                  %378 = vst [vmem:[%s264 + $0x60] sm:$0xff] %v377
                  %v379 = vld [vmem:[%s263 + $0x78] sm:$0xff]
                  %380 = vst [vmem:[%s264 + $0x68] sm:$0xff] %v379
                  %v381 = vld [vmem:[%s263 + $0x80] sm:$0xff]
                  %382 = vst [vmem:[%s264 + $0x70] sm:$0xff] %v381
                  %v383 = vld [vmem:[%s263 + $0x88] sm:$0xff]
                  %384 = vst [vmem:[%s264 + $0x78] sm:$0xff] %v383
                  %v385 = vld [vmem:[%s263 + $0x90] sm:$0xff]
                  %386 = vst [vmem:[%s264 + $0x80] sm:$0xff] %v385
                  %v387 = vld [vmem:[%s263 + $0x98] sm:$0xff]
                  %388 = vst [vmem:[%s264 + $0x88] sm:$0xff] %v387
                  %v389 = vld [vmem:[%s263 + $0xa0] sm:$0xff]
                  %390 = vst [vmem:[%s264 + $0x90] sm:$0xff] %v389
                  %v391 = vld [vmem:[%s263 + $0xa8] sm:$0xff]
                  %392 = vst [vmem:[%s264 + $0x98] sm:$0xff] %v391
                  %v393 = vld [vmem:[%s263 + $0xb0] sm:$0xff]
                  %394 = vst [vmem:[%s264 + $0xa0] sm:$0xff] %v393
                  %v395 = vld [vmem:[%s263 + $0xb8] sm:$0xff]
                  %396 = vst [vmem:[%s264 + $0xa8] sm:$0xff] %v395
                  %v397 = vld [vmem:[%s263 + $0xc0] sm:$0xff]
                  %398 = vst [vmem:[%s264 + $0xb0] sm:$0xff] %v397
                  %v399 = vld [vmem:[%s263 + $0xc8] sm:$0xff]
                  %400 = vst [vmem:[%s264 + $0xb8] sm:$0xff] %v399
                  %v401 = vld [vmem:[%s263 + $0xd0] sm:$0xff]
                  %402 = vst [vmem:[%s264 + $0xc0] sm:$0xff] %v401
                  %v403 = vld [vmem:[%s263 + $0xd8] sm:$0xff]
                  %404 = vst [vmem:[%s264 + $0xc8] sm:$0xff] %v403
                  %v405 = vld [vmem:[%s263 + $0xe0] sm:$0xff]
                  %406 = vst [vmem:[%s264 + $0xd0] sm:$0xff] %v405
                  %v407 = vld [vmem:[%s263 + $0xe8] sm:$0xff]
                  %408 = vst [vmem:[%s264 + $0xd8] sm:$0xff] %v407
                  %s409 = sadd.s32 1, %s262
                  %p410 = scmp.ge.s32.totalorder %s409, %s252
                  %s411 = scalar_select %p410, 0, %s409
                  %s412 = smul.u32 %s411, 192
                  %s413 = smul.u32 %s411, 192
                  %s414 = scalar_lea.vmem %s219, %s412
                  %s415 = scalar_lea.vmem %s208, %s413 [#allocation3]
                $region60: #{kron_linear_forward.1} parent=54 // loop_footer
                  %s259 = sadd.s32 %s257, 1
                $region61: #{kron_linear_forward.1} parent=54 // loop_footer_branch
                  %256 = sbr.rel target = $region57
                $region62: #{kron_linear_forward.1} parent=54 // loop_exit
                  _
                %s416 = sdiv.u32.pop %s251, 24
                %s417 = srem.u32.pop %s251, 24
                %s418 = smul.u32 %s416, 24
                %s419 = smul.u32 128, %s418
                %s420 = sshra.s32 %s419, 4
                %s421 = scalar_lea.vmem %s219, %s420
                %s422 = smul.u32 128, %s418
                %s423 = sshra.s32 %s422, 4
                %s424 = scalar_lea.vmem %s208, %s423 [#allocation3]
                // While loop
                $region63: #{kron_linear_forward.1} parent=54 // loop_pre_header
                  _
                $region64: #{kron_linear_forward.1} parent=54 // loop_header
                  %s428 = sphi 0, %s430
                  %p429 = scmp.ge.s32.totalorder %s428, %s417
                  %s433 = sphi 0, %s444
                  %s434 = sphi %s421, %s447
                  %s435 = sphi %s424, %s448
                $region65: #{kron_linear_forward.1} parent=54 // loop_header_branch
                  %432 = sbr.rel (%p429) target = $region69
                $region66: #{kron_linear_forward.1} parent=54 // loop_body
                  %v436 = vld [vmem:[%s434] sm:$0xff]
                  %437 = vst [vmem:[%s435] sm:$0xff] %v436
                  %v438 = vld [vmem:[%s434 + $0x18] sm:$0xff]
                  %439 = vst [vmem:[%s435 + $0x10] sm:$0xff] %v438
                  %v440 = vld [vmem:[%s434 + $0x30] sm:$0xff]
                  %441 = vst [vmem:[%s435 + $0x20] sm:$0xff] %v440
                  %s442 = sadd.s32 1, %s433
                  %p443 = scmp.ge.s32.totalorder %s442, %s417
                  %s444 = scalar_select %p443, 0, %s442
                  %s445 = smul.u32 %s444, 8
                  %s446 = smul.u32 %s444, 8
                  %s447 = scalar_lea.vmem %s421, %s445
                  %s448 = scalar_lea.vmem %s424, %s446 [#allocation3]
                $region67: #{kron_linear_forward.1} parent=54 // loop_footer
                  %s430 = sadd.s32 %s428, 1
                $region68: #{kron_linear_forward.1} parent=54 // loop_footer_branch
                  %427 = sbr.rel target = $region64
                $region69: #{kron_linear_forward.1} parent=54 // loop_exit
                  _
              $region55: #{kron_linear_forward.1} parent=39 // pred_fallthru
                _
              %p449 = pneg %p247
              // Predicated region
              $region70: #{kron_linear_forward.1} parent=39 // pred_check
                _
              $region71: #{kron_linear_forward.1} parent=39 // pred_check_branch
                %451 = sbr.rel (%p247) target = $region73
              $region72: #{kron_linear_forward.1} parent=39 // pred_region
                %s452 = sand.u32 %s220, 7
                %s453 = ssub.s32 %s220, %s452
                %s454 = scalar_lea.vmem %s219, %s453
                %s455 = ssub.s32 %s220, %s452
                %s456 = scalar_lea.vmem %s208, %s455 [#allocation3]
                %s457 = sshrl.u32 %s220, 3
                %s458 = sdiv.u32.pop %s457, 24
                %s459 = srem.u32.pop %s457, 24
                // While loop
                $region74: #{kron_linear_forward.1} parent=72 // loop_pre_header
                  _
                $region75: #{kron_linear_forward.1} parent=72 // loop_header
                  %s463 = sphi 0, %s465
                  %p464 = scmp.ge.s32.totalorder %s463, %s458
                  %s468 = sphi 0, %s617
                  %s469 = sphi %s219, %s620
                  %s470 = sphi %s208, %s621
                $region76: #{kron_linear_forward.1} parent=72 // loop_header_branch
                  %467 = sbr.rel (%p464) target = $region80
                $region77: #{kron_linear_forward.1} parent=72 // loop_body
                  %v471 = vld [vmem:[%s469] sm:$0xff]
                  %472 = vst [vmem:[%s470] sm:$0xff] %v471
                  %v473 = vld [vmem:[%s469 + $0x8] sm:$0xff]
                  %474 = vst [vmem:[%s470 + $0x8] sm:$0xff] %v473
                  %v475 = vld [vmem:[%s469 + $0x10] sm:$0xff]
                  %476 = vst [vmem:[%s470 + $0x10] sm:$0xff] %v475
                  %v477 = vld [vmem:[%s469 + $0x18] sm:$0xff]
                  %478 = vst [vmem:[%s470 + $0x18] sm:$0xff] %v477
                  %v479 = vld [vmem:[%s469 + $0x20] sm:$0xff]
                  %480 = vst [vmem:[%s470 + $0x20] sm:$0xff] %v479
                  %v481 = vld [vmem:[%s469 + $0x28] sm:$0xff]
                  %482 = vst [vmem:[%s470 + $0x28] sm:$0xff] %v481
                  %v483 = vld [vmem:[%s469 + $0x30] sm:$0xff]
                  %484 = vst [vmem:[%s470 + $0x30] sm:$0xff] %v483
                  %v485 = vld [vmem:[%s469 + $0x38] sm:$0xff]
                  %486 = vst [vmem:[%s470 + $0x38] sm:$0xff] %v485
                  %v487 = vld [vmem:[%s469 + $0x40] sm:$0xff]
                  %488 = vst [vmem:[%s470 + $0x40] sm:$0xff] %v487
                  %v489 = vld [vmem:[%s469 + $0x48] sm:$0xff]
                  %490 = vst [vmem:[%s470 + $0x48] sm:$0xff] %v489
                  %v491 = vld [vmem:[%s469 + $0x50] sm:$0xff]
                  %492 = vst [vmem:[%s470 + $0x50] sm:$0xff] %v491
                  %v493 = vld [vmem:[%s469 + $0x58] sm:$0xff]
                  %494 = vst [vmem:[%s470 + $0x58] sm:$0xff] %v493
                  %v495 = vld [vmem:[%s469 + $0x60] sm:$0xff]
                  %496 = vst [vmem:[%s470 + $0x60] sm:$0xff] %v495
                  %v497 = vld [vmem:[%s469 + $0x68] sm:$0xff]
                  %498 = vst [vmem:[%s470 + $0x68] sm:$0xff] %v497
                  %v499 = vld [vmem:[%s469 + $0x70] sm:$0xff]
                  %500 = vst [vmem:[%s470 + $0x70] sm:$0xff] %v499
                  %v501 = vld [vmem:[%s469 + $0x78] sm:$0xff]
                  %502 = vst [vmem:[%s470 + $0x78] sm:$0xff] %v501
                  %v503 = vld [vmem:[%s469 + $0x80] sm:$0xff]
                  %504 = vst [vmem:[%s470 + $0x80] sm:$0xff] %v503
                  %v505 = vld [vmem:[%s469 + $0x88] sm:$0xff]
                  %506 = vst [vmem:[%s470 + $0x88] sm:$0xff] %v505
                  %v507 = vld [vmem:[%s469 + $0x90] sm:$0xff]
                  %508 = vst [vmem:[%s470 + $0x90] sm:$0xff] %v507
                  %v509 = vld [vmem:[%s469 + $0x98] sm:$0xff]
                  %510 = vst [vmem:[%s470 + $0x98] sm:$0xff] %v509
                  %v511 = vld [vmem:[%s469 + $0xa0] sm:$0xff]
                  %512 = vst [vmem:[%s470 + $0xa0] sm:$0xff] %v511
                  %v513 = vld [vmem:[%s469 + $0xa8] sm:$0xff]
                  %514 = vst [vmem:[%s470 + $0xa8] sm:$0xff] %v513
                  %v515 = vld [vmem:[%s469 + $0xb0] sm:$0xff]
                  %516 = vst [vmem:[%s470 + $0xb0] sm:$0xff] %v515
                  %v517 = vld [vmem:[%s469 + $0xb8] sm:$0xff]
                  %518 = vst [vmem:[%s470 + $0xb8] sm:$0xff] %v517
                  %v519 = vld [vmem:[%s469 + $0x18] sm:$0xff]
                  %520 = vst [vmem:[%s470 + $0x10] sm:$0xff] %v519
                  %v521 = vld [vmem:[%s469 + $0x20] sm:$0xff]
                  %522 = vst [vmem:[%s470 + $0x18] sm:$0xff] %v521
                  %v523 = vld [vmem:[%s469 + $0x28] sm:$0xff]
                  %524 = vst [vmem:[%s470 + $0x20] sm:$0xff] %v523
                  %v525 = vld [vmem:[%s469 + $0x30] sm:$0xff]
                  %526 = vst [vmem:[%s470 + $0x28] sm:$0xff] %v525
                  %v527 = vld [vmem:[%s469 + $0x38] sm:$0xff]
                  %528 = vst [vmem:[%s470 + $0x30] sm:$0xff] %v527
                  %v529 = vld [vmem:[%s469 + $0x40] sm:$0xff]
                  %530 = vst [vmem:[%s470 + $0x38] sm:$0xff] %v529
                  %v531 = vld [vmem:[%s469 + $0x48] sm:$0xff]
                  %532 = vst [vmem:[%s470 + $0x40] sm:$0xff] %v531
                  %v533 = vld [vmem:[%s469 + $0x50] sm:$0xff]
                  %534 = vst [vmem:[%s470 + $0x48] sm:$0xff] %v533
                  %v535 = vld [vmem:[%s469 + $0x58] sm:$0xff]
                  %536 = vst [vmem:[%s470 + $0x50] sm:$0xff] %v535
                  %v537 = vld [vmem:[%s469 + $0x60] sm:$0xff]
                  %538 = vst [vmem:[%s470 + $0x58] sm:$0xff] %v537
                  %v539 = vld [vmem:[%s469 + $0x68] sm:$0xff]
                  %540 = vst [vmem:[%s470 + $0x60] sm:$0xff] %v539
                  %v541 = vld [vmem:[%s469 + $0x70] sm:$0xff]
                  %542 = vst [vmem:[%s470 + $0x68] sm:$0xff] %v541
                  %v543 = vld [vmem:[%s469 + $0x78] sm:$0xff]
                  %544 = vst [vmem:[%s470 + $0x70] sm:$0xff] %v543
                  %v545 = vld [vmem:[%s469 + $0x80] sm:$0xff]
                  %546 = vst [vmem:[%s470 + $0x78] sm:$0xff] %v545
                  %v547 = vld [vmem:[%s469 + $0x88] sm:$0xff]
                  %548 = vst [vmem:[%s470 + $0x80] sm:$0xff] %v547
                  %v549 = vld [vmem:[%s469 + $0x90] sm:$0xff]
                  %550 = vst [vmem:[%s470 + $0x88] sm:$0xff] %v549
                  %v551 = vld [vmem:[%s469 + $0x98] sm:$0xff]
                  %552 = vst [vmem:[%s470 + $0x90] sm:$0xff] %v551
                  %v553 = vld [vmem:[%s469 + $0xa0] sm:$0xff]
                  %554 = vst [vmem:[%s470 + $0x98] sm:$0xff] %v553
                  %v555 = vld [vmem:[%s469 + $0xa8] sm:$0xff]
                  %556 = vst [vmem:[%s470 + $0xa0] sm:$0xff] %v555
                  %v557 = vld [vmem:[%s469 + $0xb0] sm:$0xff]
                  %558 = vst [vmem:[%s470 + $0xa8] sm:$0xff] %v557
                  %v559 = vld [vmem:[%s469 + $0xb8] sm:$0xff]
                  %560 = vst [vmem:[%s470 + $0xb0] sm:$0xff] %v559
                  %v561 = vld [vmem:[%s469 + $0xc0] sm:$0xff]
                  %562 = vst [vmem:[%s470 + $0xb8] sm:$0xff] %v561
                  %v563 = vld [vmem:[%s469 + $0xc8] sm:$0xff]
                  %564 = vst [vmem:[%s470 + $0xc0] sm:$0xff] %v563
                  %v565 = vld [vmem:[%s469 + $0xd0] sm:$0xff]
                  %566 = vst [vmem:[%s470 + $0xc8] sm:$0xff] %v565
                  %v567 = vld [vmem:[%s469 + $0x30] sm:$0xff]
                  %568 = vst [vmem:[%s470 + $0x20] sm:$0xff] %v567
                  %v569 = vld [vmem:[%s469 + $0x38] sm:$0xff]
                  %570 = vst [vmem:[%s470 + $0x28] sm:$0xff] %v569
                  %v571 = vld [vmem:[%s469 + $0x40] sm:$0xff]
                  %572 = vst [vmem:[%s470 + $0x30] sm:$0xff] %v571
                  %v573 = vld [vmem:[%s469 + $0x48] sm:$0xff]
                  %574 = vst [vmem:[%s470 + $0x38] sm:$0xff] %v573
                  %v575 = vld [vmem:[%s469 + $0x50] sm:$0xff]
                  %576 = vst [vmem:[%s470 + $0x40] sm:$0xff] %v575
                  %v577 = vld [vmem:[%s469 + $0x58] sm:$0xff]
                  %578 = vst [vmem:[%s470 + $0x48] sm:$0xff] %v577
                  %v579 = vld [vmem:[%s469 + $0x60] sm:$0xff]
                  %580 = vst [vmem:[%s470 + $0x50] sm:$0xff] %v579
                  %v581 = vld [vmem:[%s469 + $0x68] sm:$0xff]
                  %582 = vst [vmem:[%s470 + $0x58] sm:$0xff] %v581
                  %v583 = vld [vmem:[%s469 + $0x70] sm:$0xff]
                  %584 = vst [vmem:[%s470 + $0x60] sm:$0xff] %v583
                  %v585 = vld [vmem:[%s469 + $0x78] sm:$0xff]
                  %586 = vst [vmem:[%s470 + $0x68] sm:$0xff] %v585
                  %v587 = vld [vmem:[%s469 + $0x80] sm:$0xff]
                  %588 = vst [vmem:[%s470 + $0x70] sm:$0xff] %v587
                  %v589 = vld [vmem:[%s469 + $0x88] sm:$0xff]
                  %590 = vst [vmem:[%s470 + $0x78] sm:$0xff] %v589
                  %v591 = vld [vmem:[%s469 + $0x90] sm:$0xff]
                  %592 = vst [vmem:[%s470 + $0x80] sm:$0xff] %v591
                  %v593 = vld [vmem:[%s469 + $0x98] sm:$0xff]
                  %594 = vst [vmem:[%s470 + $0x88] sm:$0xff] %v593
                  %v595 = vld [vmem:[%s469 + $0xa0] sm:$0xff]
                  %596 = vst [vmem:[%s470 + $0x90] sm:$0xff] %v595
                  %v597 = vld [vmem:[%s469 + $0xa8] sm:$0xff]
                  %598 = vst [vmem:[%s470 + $0x98] sm:$0xff] %v597
                  %v599 = vld [vmem:[%s469 + $0xb0] sm:$0xff]
                  %600 = vst [vmem:[%s470 + $0xa0] sm:$0xff] %v599
                  %v601 = vld [vmem:[%s469 + $0xb8] sm:$0xff]
                  %602 = vst [vmem:[%s470 + $0xa8] sm:$0xff] %v601
                  %v603 = vld [vmem:[%s469 + $0xc0] sm:$0xff]
                  %604 = vst [vmem:[%s470 + $0xb0] sm:$0xff] %v603
                  %v605 = vld [vmem:[%s469 + $0xc8] sm:$0xff]
                  %606 = vst [vmem:[%s470 + $0xb8] sm:$0xff] %v605
                  %v607 = vld [vmem:[%s469 + $0xd0] sm:$0xff]
                  %608 = vst [vmem:[%s470 + $0xc0] sm:$0xff] %v607
                  %v609 = vld [vmem:[%s469 + $0xd8] sm:$0xff]
                  %610 = vst [vmem:[%s470 + $0xc8] sm:$0xff] %v609
                  %v611 = vld [vmem:[%s469 + $0xe0] sm:$0xff]
                  %612 = vst [vmem:[%s470 + $0xd0] sm:$0xff] %v611
                  %v613 = vld [vmem:[%s469 + $0xe8] sm:$0xff]
                  %614 = vst [vmem:[%s470 + $0xd8] sm:$0xff] %v613
                  %s615 = sadd.s32 1, %s468
                  %p616 = scmp.ge.s32.totalorder %s615, %s458
                  %s617 = scalar_select %p616, 0, %s615
                  %s618 = smul.u32 %s617, 192
                  %s619 = smul.u32 %s617, 192
                  %s620 = scalar_lea.vmem %s219, %s618
                  %s621 = scalar_lea.vmem %s208, %s619 [#allocation3]
                $region78: #{kron_linear_forward.1} parent=72 // loop_footer
                  %s465 = sadd.s32 %s463, 1
                $region79: #{kron_linear_forward.1} parent=72 // loop_footer_branch
                  %462 = sbr.rel target = $region75
                $region80: #{kron_linear_forward.1} parent=72 // loop_exit
                  _
                %s622 = sdiv.u32.pop %s457, 24
                %s623 = srem.u32.pop %s457, 24
                %s624 = smul.u32 %s622, 24
                %s625 = smul.u32 128, %s624
                %s626 = sshra.s32 %s625, 4
                %s627 = scalar_lea.vmem %s219, %s626
                %s628 = smul.u32 128, %s624
                %s629 = sshra.s32 %s628, 4
                %s630 = scalar_lea.vmem %s208, %s629 [#allocation3]
                // While loop
                $region81: #{kron_linear_forward.1} parent=72 // loop_pre_header
                  _
                $region82: #{kron_linear_forward.1} parent=72 // loop_header
                  %s634 = sphi 0, %s636
                  %p635 = scmp.ge.s32.totalorder %s634, %s623
                  %s639 = sphi 0, %s650
                  %s640 = sphi %s627, %s653
                  %s641 = sphi %s630, %s654
                $region83: #{kron_linear_forward.1} parent=72 // loop_header_branch
                  %638 = sbr.rel (%p635) target = $region87
                $region84: #{kron_linear_forward.1} parent=72 // loop_body
                  %v642 = vld [vmem:[%s640] sm:$0xff]
                  %643 = vst [vmem:[%s641] sm:$0xff] %v642
                  %v644 = vld [vmem:[%s640 + $0x18] sm:$0xff]
                  %645 = vst [vmem:[%s641 + $0x10] sm:$0xff] %v644
                  %v646 = vld [vmem:[%s640 + $0x30] sm:$0xff]
                  %647 = vst [vmem:[%s641 + $0x20] sm:$0xff] %v646
                  %s648 = sadd.s32 1, %s639
                  %p649 = scmp.ge.s32.totalorder %s648, %s623
                  %s650 = scalar_select %p649, 0, %s648
                  %s651 = smul.u32 %s650, 8
                  %s652 = smul.u32 %s650, 8
                  %s653 = scalar_lea.vmem %s627, %s651
                  %s654 = scalar_lea.vmem %s630, %s652 [#allocation3]
                $region85: #{kron_linear_forward.1} parent=72 // loop_footer
                  %s636 = sadd.s32 %s634, 1
                $region86: #{kron_linear_forward.1} parent=72 // loop_footer_branch
                  %633 = sbr.rel target = $region82
                $region87: #{kron_linear_forward.1} parent=72 // loop_exit
                  _
                %s655 = sshllo.u32 0, %s452
                loop: start=0, step=1, limit=1
                $region88: #{kron_linear_forward.1} parent=72 // loop_pre_header
                  _
                $region89: #{kron_linear_forward.1} parent=72 // loop_header
                  %s657 = sphi 0, %s661
                  %p658 = scmp.ge.s32.totalorder %s657, 1
                  %s662 = sphi %s454, %s454
                  %s663 = sphi %s456, %s456
                $region90: #{kron_linear_forward.1} parent=72 // loop_header_branch
                  %660 = sbr.rel (%p658) target = $region94
                $region91: #{kron_linear_forward.1} parent=72 // loop_body
                  %v664 = vld [vmem:[%s662] sm:%s655]
                  %665 = vst [vmem:[%s663] sm:%s655] %v664
                  %v666 = vld [vmem:[%s662 + $0x18] sm:%s655]
                  %667 = vst [vmem:[%s663 + $0x10] sm:%s655] %v666
                  %v668 = vld [vmem:[%s662 + $0x30] sm:%s655]
                  %669 = vst [vmem:[%s663 + $0x20] sm:%s655] %v668
                $region92: #{kron_linear_forward.1} parent=72 // loop_footer
                  %s661 = sadd.s32 1, %s657
                $region93: #{kron_linear_forward.1} parent=72 // loop_footer_branch
                  %656 = sbr.rel target = $region89
                $region94: #{kron_linear_forward.1} parent=72 // loop_exit
                  _
              $region73: #{kron_linear_forward.1} parent=39 // pred_fallthru
                _
            $region40: #{kron_linear_forward.1} parent=35 // pred_fallthru
              _
            // Predicated region
            $region41: #{kron_linear_forward.1} parent=35 // pred_check
              %p228 = pneg %p224
            $region42: #{kron_linear_forward.1} parent=35 // pred_check_branch
              %230 = sbr.rel (%p228) target = $region44
            $region43: #{kron_linear_forward.1} parent=35 // pred_region
              %s231 = sshllo.u32 0, %s220
              loop: start=0, step=1, limit=1
              $region45: #{kron_linear_forward.1} parent=43 // loop_pre_header
                _
              $region46: #{kron_linear_forward.1} parent=43 // loop_header
                %s233 = sphi 0, %s237
                %p234 = scmp.ge.s32.totalorder %s233, 1
                %s238 = sphi %s219, %s219
                %s239 = sphi %s208, %s208
              $region47: #{kron_linear_forward.1} parent=43 // loop_header_branch
                %236 = sbr.rel (%p234) target = $region51
              $region48: #{kron_linear_forward.1} parent=43 // loop_body
                %v240 = vld [vmem:[%s238] sm:%s231]
                %241 = vst [vmem:[%s239] sm:%s231] %v240
                %v242 = vld [vmem:[%s238 + $0x18] sm:%s231]
                %243 = vst [vmem:[%s239 + $0x10] sm:%s231] %v242
                %v244 = vld [vmem:[%s238 + $0x30] sm:%s231]
                %245 = vst [vmem:[%s239 + $0x20] sm:%s231] %v244
              $region49: #{kron_linear_forward.1} parent=43 // loop_footer
                %s237 = sadd.s32 1, %s233
              $region50: #{kron_linear_forward.1} parent=43 // loop_footer_branch
                %232 = sbr.rel target = $region46
              $region51: #{kron_linear_forward.1} parent=43 // loop_exit
                _
            $region44: #{kron_linear_forward.1} parent=35 // pred_fallthru
              _
          $region36: #{kron_linear_forward.1} parent=31 // pred_fallthru
            _
          %670 = vnop
        $region32: #{kron_linear_forward.1} parent=23 // pred_fallthru
          _
      $region24: #{kron_linear_forward.1} parent=5 // pred_fallthru
        _
      %p671 = scmp.le.s32.totalorder 1, %s13
      %p672 = scmp.lt.s32.totalorder %s13, 3
      %p673 = pnand %p671, %p672
      %p674 = pneg %p673
      // Predicated region
      $region95: #{kron_linear_forward.1} parent=5 // pred_check
        _
      $region96: #{kron_linear_forward.1} parent=5 // pred_check_branch
        %676 = sbr.rel (%p673) target = $region98
      $region97: #{kron_linear_forward.1} parent=5 // pred_region
        %s677 = ssub.s32 %s13, 1
        %s678 = sand.u32 %s113, 1
        %s679 = sand.u32 %s113, 1
        %s680 = smul.addr %s679, 48
        %s681 = scalar_lea.vmem [#allocation3], %s680
        // Predicated region
        $region99: #{kron_linear_forward.1} parent=97 // pred_check
          %p682 = pneg %p126
        $region100: #{kron_linear_forward.1} parent=97 // pred_check_branch
          %684 = sbr.rel (%p682) target = $region102
        $region101: #{kron_linear_forward.1} parent=97 // pred_region
          _
        $region102: #{kron_linear_forward.1} parent=97 // pred_fallthru
          _
        %s685 = smul.u32 3, %s22
        %p686 = scmp.lt.s32.totalorder %s685, 2
        %s687 = scalar_select %p686, %s685, 2
        %s688 = smul.addr %s687, 8
        %s689 = scalar_lea.vmem %s0, %s688
        %p690 = pneg %p51
        %p691 = pneg %p48
        %p692 = pneg %p72
        %p693 = pneg %p69
        %s694 = smul.u32 32, %s23
        %s695 = ssub.s32 40, %s694
        %p696 = scmp.lt.s32.totalorder %s695, 32
        %s697 = scalar_select %p696, %s695, 32
        %s698 = smul.u32 128, %s697
        %p699 = scmp.lt.s32.totalorder %s694, 39
        %s700 = scalar_select %p699, %s694, 39
        %s701 = smul.addr %s700, 8
        %s702 = scalar_lea.vmem %s2, %s701
        %p703 = pneg %p98
        %p704 = pneg %p95
        %s705 = sand.u32 %s113, 1
        %s706 = sand.u32 %s113, 1
        %s707 = smul.addr %s706, 48
        %s708 = scalar_lea.vmem [#allocation3], %s707
        %p709 = pneg %p126
        %p710 = pneg %p123
        %p711 = pneg %p154
        %p712 = pneg %p151
        %s713 = sand.u32 %s141, 1
        %s714 = scalar_lea.sflag [#allocation5], %s713
        %s715 = sand.u32 %s141, 1
        %s716 = smul.addr %s715, 48
        %s717 = scalar_lea.vmem [#allocation4], %s716
        %s718 = smul.u32 3, %s22
        %p719 = scmp.lt.s32.totalorder %s718, 2
        %s720 = scalar_select %p719, %s718, 2
        %s721 = smul.addr %s720, 8
        %s722 = scalar_lea.vmem %s0, %s721
        %s723 = smul.u32 3, %s22
        %s724 = smul.u32 32, %s23
        %s725 = ssub.s32 40, %s724
        %p726 = scmp.lt.s32.totalorder %s725, 32
        %s727 = scalar_select %p726, %s725, 32
        %s728 = smul.u32 128, %s727
        %p729 = scmp.lt.s32.totalorder %s724, 39
        %s730 = scalar_select %p729, %s724, 39
        %s731 = smul.addr %s730, 8
        %s732 = scalar_lea.vmem %s2, %s731
        %s733 = smul.u32 32, %s23
        %s734 = ssub.s32 40, %s733
        %p735 = scmp.lt.s32.totalorder %s734, 32
        %s736 = scalar_select %p735, %s734, 32
        %s737 = smul.u32 128, %s736
        %s738 = smul.u32 3, %s22
        %s739 = smul.u32 2, %s23
        %s740 = ssub.s32 3, %s739
        %p741 = scmp.lt.s32.totalorder %s740, 2
        %s742 = scalar_select %p741, %s740, 2
        %s743 = smul.u32 384, %s742
        %s744 = smul.u32 3, %s22
        %s745 = smul.u32 2, %s23
        %s746 = ssub.s32 3, %s745
        %p747 = scmp.lt.s32.totalorder %s746, 2
        %s748 = scalar_select %p747, %s746, 2
        %s749 = smul.u32 384, %s748
        %p750 = scmp.eq.s32.totalorder %s23, 0
        // Predicated region
        $region103: #{kron_linear_forward.1} parent=97 // pred_check
          %p751 = pneg %p750
        $region104: #{kron_linear_forward.1} parent=97 // pred_check_branch
          %753 = sbr.rel (%p751) target = $region106
        $region105: #{kron_linear_forward.1} parent=97 // pred_region
          %v754 = vld [vmem:[%s722] sm:$0xff]
          %v755 = vld [vmem:[%s722 + $0x8] sm:$0xff]
          %v756 = vld [vmem:[%s722 + $0x10] sm:$0xff]
          %v757 = vld [vmem:[%s1] sm:$0xff]
          %v758 = vld [vmem:[%s1 + $0x8] sm:$0xff]
          %v759 = vld [vmem:[%s1 + $0x10] sm:$0xff]
          %v760 = vld [vmem:[%s1 + $0x18] sm:$0xff]
          %vm761 = vcmask 261120
          %v763 = vsel %vm761, %v754, 0
          %v766 = vsel %vm761, %v755, 0
          %v769 = vsel %vm761, %v756, 0
          %771 = vmatprep.subr.mxu0 0.0
          %772 = vmatpush1.msra.mxu0 %v757
          %773 = vmatprep.subr.mxu0 0.0
          %774 = vmatpush1.msra.mxu0 %v758
          %775 = vmatprep.subr.mxu0 0.0
          %776 = vmatpush1.msra.mxu0 %v759
          %777 = vmatprep.subr.mxu0 0.0
          %778 = vmatpush1.msra.mxu0 %v760
          %779 = vmatprep.subr.mxu0 0.0
          %780 = vmatpush1.msra.mxu0 0.0
          %781 = vmatprep.subr.mxu0 0.0
          %782 = vmatpush1.msra.mxu0 0.0
          %783 = vmatprep.subr.mxu0 0.0
          %784 = vmatpush1.msra.mxu0 0.0
          %785 = vmatprep.subr.mxu0 0.0
          %786 = vmatpush1.msra.mxu0 0.0
          %787 = vmatprep.subr.mxu0 0.0
          %788 = vmatpush1.msra.mxu0 0.0
          %789 = vmatprep.subr.mxu0 0.0
          %790 = vmatpush1.msra.mxu0 0.0
          %791 = vmatprep.subr.mxu0 0.0
          %792 = vmatpush1.msra.mxu0 0.0
          %793 = vmatprep.subr.mxu0 0.0
          %794 = vmatpush1.msra.mxu0 0.0
          %795 = vmatprep.subr.mxu0 0.0
          %796 = vmatpush1.msra.mxu0 0.0
          %797 = vmatprep.subr.mxu0 0.0
          %798 = vmatpush1.msra.mxu0 0.0
          %799 = vmatprep.subr.mxu0 0.0
          %800 = vmatpush1.msra.mxu0 0.0
          %801 = vmatprep.subr.mxu0 0.0
          %802 = vmatpush1.msra.mxu0 0.0
          %803 = vmatprep.subr.mxu0 0.0
          %804 = vmatpush1.msra.mxu0 0.0
          %805 = vmatprep.subr.mxu0 0.0
          %806 = vmatpush1.msra.mxu0 0.0
          %807 = vmatprep.subr.mxu0 0.0
          %808 = vmatpush1.msra.mxu0 0.0
          %809 = vmatprep.subr.mxu0 0.0
          %810 = vmatpush1.msra.mxu0 0.0
          %811 = vmatprep.subr.mxu0 0.0
          %812 = vmatpush1.msra.mxu0 0.0
          %813 = vmatprep.subr.mxu0 0.0
          %814 = vmatpush1.msra.mxu0 0.0
          %815 = vmatprep.subr.mxu0 0.0
          %816 = vmatpush1.msra.mxu0 0.0
          %817 = vmatprep.subr.mxu0 0.0
          %818 = vmatpush1.msra.mxu0 0.0
          %819 = vmatprep.subr.mxu0 0.0
          %820 = vmatpush1.msra.mxu0 0.0
          %821 = vmatprep.subr.mxu0 0.0
          %822 = vmatpush1.msra.mxu0 0.0
          %823 = vmatprep.subr.mxu0 0.0
          %824 = vmatpush1.msra.mxu0 0.0
          %825 = vmatprep.subr.mxu0 0.0
          %826 = vmatpush1.msra.mxu0 0.0
          %827 = vmatprep.subr.mxu0 0.0
          %828 = vmatpush1.msra.mxu0 0.0
          %829 = vmatprep.subr.mxu0 0.0
          %830 = vmatpush1.msra.mxu0 0.0
          %831 = vmatprep.subr.mxu0 0.0
          %832 = vmatpush1.msra.mxu0 0.0
          %833 = vmatprep.subr.mxu0 0.0
          %834 = vmatpush1.msra.mxu0 0.0
          %835 = vmatprep.mubr.f32.mxu0 0.0
          %836 = vmatmul.mubr.f32.gmra.mrb[0].mxu0 %v763
          %v837 = vpop.f32.mrb[0].mxu0
          %v838 = vadd.f32 0.0, %v837
          %v839 = vpop.f32.mrb[0].mxu0
          %840 = vmatprep.mubr.f32.mxu0 0.0
          %841 = vmatmul.mubr.f32.gmra.mrb[0].mxu0 %v766
          %v842 = vpop.f32.mrb[0].mxu0
          %v843 = vadd.f32 0.0, %v842
          %v844 = vpop.f32.mrb[0].mxu0
          %845 = vmatprep.mubr.f32.mxu0 0.0
          %846 = vmatmul.mubr.f32.gmra.mrb[0].mxu0 %v769
          %v847 = vpop.f32.mrb[0].mxu0
          %v848 = vadd.f32 0.0, %v847
          %v849 = vpop.f32.mrb[0].mxu0
          %850 = vdwg.mxu0
          %vm851 = vcmask 523264
          %852 = vst.msk [vmem:[#allocation2] sm:$0xff] %vm851, %v838
          %853 = vst.msk [vmem:[#allocation2 + $0x8] sm:$0xff] %vm851, %v843
          %854 = vst.msk [vmem:[#allocation2 + $0x10] sm:$0xff] %vm851, %v848
        $region106: #{kron_linear_forward.1} parent=97 // pred_fallthru
          _
        %v855 = vld [vmem:[#allocation2] sm:$0xff]
        %v856 = vld [vmem:[#allocation2 + $0x8] sm:$0xff]
        %v857 = vld [vmem:[#allocation2 + $0x10] sm:$0xff]
        %v858 = vld [vmem:[%s732] sm:$0xff]
        %v859 = vld [vmem:[%s732 + $0x8] sm:$0xff]
        %v860 = vld [vmem:[%s732 + $0x10] sm:$0xff]
        %v861 = vld [vmem:[%s732 + $0x18] sm:$0xff]
        %v862 = vld [vmem:[%s732 + $0x20] sm:$0xff]
        %v863 = vld [vmem:[%s732 + $0x28] sm:$0xff]
        %v864 = vld [vmem:[%s732 + $0x30] sm:$0xff]
        %v865 = vld [vmem:[%s732 + $0x38] sm:$0xff]
        %v866 = vld [vmem:[%s732 + $0x40] sm:$0xff]
        %v867 = vld [vmem:[%s732 + $0x48] sm:$0xff]
        %v868 = vld [vmem:[%s732 + $0x50] sm:$0xff]
        %v869 = vld [vmem:[%s732 + $0x58] sm:$0xff]
        %v870 = vld [vmem:[%s732 + $0x60] sm:$0xff]
        %v871 = vld [vmem:[%s732 + $0x68] sm:$0xff]
        %v872 = vld [vmem:[%s732 + $0x70] sm:$0xff]
        %v873 = vld [vmem:[%s732 + $0x78] sm:$0xff]
        %v874 = vld [vmem:[%s732 + $0x80] sm:$0xff]
        %v875 = vld [vmem:[%s732 + $0x88] sm:$0xff]
        %v876 = vld [vmem:[%s732 + $0x90] sm:$0xff]
        %v877 = vld [vmem:[%s732 + $0x98] sm:$0xff]
        %v878 = vld [vmem:[%s732 + $0xa0] sm:$0xff]
        %v879 = vld [vmem:[%s732 + $0xa8] sm:$0xff]
        %v880 = vld [vmem:[%s732 + $0xb0] sm:$0xff]
        %v881 = vld [vmem:[%s732 + $0xb8] sm:$0xff]
        %v882 = vld [vmem:[%s732 + $0xc0] sm:$0xff]
        %v883 = vld [vmem:[%s732 + $0xc8] sm:$0xff]
        %v884 = vld [vmem:[%s732 + $0xd0] sm:$0xff]
        %v885 = vld [vmem:[%s732 + $0xd8] sm:$0xff]
        %v886 = vld [vmem:[%s732 + $0xe0] sm:$0xff]
        %v887 = vld [vmem:[%s732 + $0xe8] sm:$0xff]
        %v888 = vld [vmem:[%s732 + $0xf0] sm:$0xff]
        %v889 = vld [vmem:[%s732 + $0xf8] sm:$0xff]
        %v890 = vld [vmem:[%s681] sm:$0xff]
        %v891 = vld [vmem:[%s681 + $0x8] sm:$0xff]
        %v892 = vld [vmem:[%s681 + $0x10] sm:$0xff]
        %v893 = vld [vmem:[%s681 + $0x18] sm:$0xff]
        %v894 = vld [vmem:[%s681 + $0x20] sm:$0xff]
        %v895 = vld [vmem:[%s681 + $0x28] sm:$0xff]
        %vm896 = vcmask 523264
        %v898 = vsel %vm896, %v855, 0
        %v901 = vsel %vm896, %v856, 0
        %v904 = vsel %vm896, %v857, 0
        %v907 = vsel %vm896, %v858, 0
        %v910 = vsel %vm896, %v859, 0
        %v913 = vsel %vm896, %v860, 0
        %v916 = vsel %vm896, %v861, 0
        %v919 = vsel %vm896, %v862, 0
        %v922 = vsel %vm896, %v863, 0
        %v925 = vsel %vm896, %v864, 0
        %v928 = vsel %vm896, %v865, 0
        %v931 = vsel %vm896, %v866, 0
        %v934 = vsel %vm896, %v867, 0
        %v937 = vsel %vm896, %v868, 0
        %v940 = vsel %vm896, %v869, 0
        %v943 = vsel %vm896, %v870, 0
        %v946 = vsel %vm896, %v871, 0
        %v949 = vsel %vm896, %v872, 0
        %v952 = vsel %vm896, %v873, 0
        %v955 = vsel %vm896, %v874, 0
        %v958 = vsel %vm896, %v875, 0
        %v961 = vsel %vm896, %v876, 0
        %v964 = vsel %vm896, %v877, 0
        %v967 = vsel %vm896, %v878, 0
        %v970 = vsel %vm896, %v879, 0
        %v973 = vsel %vm896, %v880, 0
        %v976 = vsel %vm896, %v881, 0
        %v979 = vsel %vm896, %v882, 0
        %v982 = vsel %vm896, %v883, 0
        %v985 = vsel %vm896, %v884, 0
        %v988 = vsel %vm896, %v885, 0
        %v991 = vsel %vm896, %v886, 0
        %v994 = vsel %vm896, %v887, 0
        %v997 = vsel %vm896, %v888, 0
        %v1000 = vsel %vm896, %v889, 0
        %1002 = vmatprep.subr.mxu0 0.0
        %1003 = vmatpush1.xpose.msra.mxu0 %v907
        %1004 = vmatprep.subr.mxu0 0.0
        %1005 = vmatpush1.xpose.msra.mxu0 %v910
        %1006 = vmatprep.subr.mxu0 0.0
        %1007 = vmatpush1.xpose.msra.mxu0 %v913
        %1008 = vmatprep.subr.mxu0 0.0
        %1009 = vmatpush1.xpose.msra.mxu0 %v916
        %1010 = vmatprep.subr.mxu0 0.0
        %1011 = vmatpush1.xpose.msra.mxu0 %v919
        %1012 = vmatprep.subr.mxu0 0.0
        %1013 = vmatpush1.xpose.msra.mxu0 %v922
        %1014 = vmatprep.subr.mxu0 0.0
        %1015 = vmatpush1.xpose.msra.mxu0 %v925
        %1016 = vmatprep.subr.mxu0 0.0
        %1017 = vmatpush1.xpose.msra.mxu0 %v928
        %1018 = vmatprep.subr.mxu0 0.0
        %1019 = vmatpush1.xpose.msra.mxu0 %v931
        %1020 = vmatprep.subr.mxu0 0.0
        %1021 = vmatpush1.xpose.msra.mxu0 %v934
        %1022 = vmatprep.subr.mxu0 0.0
        %1023 = vmatpush1.xpose.msra.mxu0 %v937
        %1024 = vmatprep.subr.mxu0 0.0
        %1025 = vmatpush1.xpose.msra.mxu0 %v940
        %1026 = vmatprep.subr.mxu0 0.0
        %1027 = vmatpush1.xpose.msra.mxu0 %v943
        %1028 = vmatprep.subr.mxu0 0.0
        %1029 = vmatpush1.xpose.msra.mxu0 %v946
        %1030 = vmatprep.subr.mxu0 0.0
        %1031 = vmatpush1.xpose.msra.mxu0 %v949
        %1032 = vmatprep.subr.mxu0 0.0
        %1033 = vmatpush1.xpose.msra.mxu0 %v952
        %1034 = vmatprep.subr.mxu0 0.0
        %1035 = vmatpush1.xpose.msra.mxu0 %v955
        %1036 = vmatprep.subr.mxu0 0.0
        %1037 = vmatpush1.xpose.msra.mxu0 %v958
        %1038 = vmatprep.subr.mxu0 0.0
        %1039 = vmatpush1.xpose.msra.mxu0 %v961
        %1040 = vmatprep.subr.mxu0 0.0
        %1041 = vmatpush1.xpose.msra.mxu0 %v964
        %1042 = vmatprep.subr.mxu0 0.0
        %1043 = vmatpush1.xpose.msra.mxu0 %v967
        %1044 = vmatprep.subr.mxu0 0.0
        %1045 = vmatpush1.xpose.msra.mxu0 %v970
        %1046 = vmatprep.subr.mxu0 0.0
        %1047 = vmatpush1.xpose.msra.mxu0 %v973
        %1048 = vmatprep.subr.mxu0 0.0
        %1049 = vmatpush1.xpose.msra.mxu0 %v976
        %1050 = vmatprep.subr.mxu0 0.0
        %1051 = vmatpush1.xpose.msra.mxu0 %v979
        %1052 = vmatprep.subr.mxu0 0.0
        %1053 = vmatpush1.xpose.msra.mxu0 %v982
        %1054 = vmatprep.subr.mxu0 0.0
        %1055 = vmatpush1.xpose.msra.mxu0 %v985
        %1056 = vmatprep.subr.mxu0 0.0
        %1057 = vmatpush1.xpose.msra.mxu0 %v988
        %1058 = vmatprep.subr.mxu0 0.0
        %1059 = vmatpush1.xpose.msra.mxu0 %v991
        %1060 = vmatprep.subr.mxu0 0.0
        %1061 = vmatpush1.xpose.msra.mxu0 %v994
        %1062 = vmatprep.subr.mxu0 0.0
        %1063 = vmatpush1.xpose.msra.mxu0 %v997
        %1064 = vmatprep.subr.mxu0 0.0
        %1065 = vmatpush1.xpose.msra.mxu0 %v1000
        %1066 = vmatprep.mubr.f32.mxu0 0.0
        %1067 = vmatmul.mubr.f32.gmra.mrb[0].mxu0 %v898
        %v1068 = vpop.f32.mrb[0].mxu0
        %v1069 = vadd.f32 %v890, %v1068
        %v1070 = vpop.f32.mrb[0].mxu0
        %v1071 = vadd.f32 %v891, %v1070
        %1072 = vmatprep.mubr.f32.mxu0 0.0
        %1073 = vmatmul.mubr.f32.gmra.mrb[0].mxu0 %v901
        %v1074 = vpop.f32.mrb[0].mxu0
        %v1075 = vadd.f32 %v892, %v1074
        %v1076 = vpop.f32.mrb[0].mxu0
        %v1077 = vadd.f32 %v893, %v1076
        %1078 = vmatprep.mubr.f32.mxu0 0.0
        %1079 = vmatmul.mubr.f32.gmra.mrb[0].mxu0 %v904
        %v1080 = vpop.f32.mrb[0].mxu0
        %v1081 = vadd.f32 %v894, %v1080
        %v1082 = vpop.f32.mrb[0].mxu0
        %v1083 = vadd.f32 %v895, %v1082
        %1084 = vdwg.mxu0
        %1085 = vst [vmem:[%s717] sm:$0xff] %v1069
        %1086 = vst [vmem:[%s717 + $0x8] sm:$0xff] %v1071
        %1087 = vst [vmem:[%s717 + $0x10] sm:$0xff] %v1075
        %1088 = vst [vmem:[%s717 + $0x18] sm:$0xff] %v1077
        %1089 = vst [vmem:[%s717 + $0x20] sm:$0xff] %v1081
        %1090 = vst [vmem:[%s717 + $0x28] sm:$0xff] %v1083
        %s1091 = sand.u32 %s141, 1
        %s1092 = scalar_lea.sflag [#allocation5], %s1091
        %s1093 = sand.u32 %s141, 1
        %s1094 = smul.addr %s1093, 48
        %s1095 = scalar_lea.vmem [#allocation4], %s1094
        // Predicated region
        $region107: #{kron_linear_forward.1} parent=97 // pred_check
          %p1096 = pneg %p151
        $region108: #{kron_linear_forward.1} parent=97 // pred_check_branch
          %1098 = sbr.rel (%p1096) target = $region110
        $region109: #{kron_linear_forward.1} parent=97 // pred_region
          %s1099 = smul.u32 3, %s22
          %s1100 = smul.u32 2, %s23
          %s1101 = ssub.s32 3, %s1100
          %p1102 = scmp.lt.s32.totalorder %s1101, 2
          %s1103 = scalar_select %p1102, %s1101, 2
          %s1104 = smul.u32 384, %s1103
          %s1106 = ssub.s32 768, %s1104
          %1107 = vsyncadd %s1092, %s1106
          %p1108 = scmp.ne.s32.totalorder 0, %s1104
          %s1109 = smul.addr %s1099, 3
          %s1110 = sadd.s32 %s1100, %s1109
          %s1111 = smul.addr %s1110, 128
          %s1112 = scalar_lea.hbm %s4, %s1111
          %s1113 = smul.u32 %s1103, 8
          %s1114 = smul.u32 %s1113, 3
          %s1115 = sshll.u32 %s1095, 4
          %s1116 = int_to_ptr.vmem [resolvable:$true] %s1115
          %s1117 = sshll.u32 %s1114, 4
          %1121 = dma.vmem_to_hbm [thread:$0]  (%p1108), %s1116, %s1117, %s1112, %s1092, 256, 384, %s1113
        $region110: #{kron_linear_forward.1} parent=97 // pred_fallthru
          _
      $region98: #{kron_linear_forward.1} parent=5 // pred_fallthru
        _
      %p1122 = scmp.le.s32.totalorder 2, %s13
      // Predicated region
      $region111: #{kron_linear_forward.1} parent=5 // pred_check
        %p1123 = pneg %p1122
      $region112: #{kron_linear_forward.1} parent=5 // pred_check_branch
        %1125 = sbr.rel (%p1123) target = $region114
      $region113: #{kron_linear_forward.1} parent=5 // pred_region
        %s1126 = ssub.s32 %s13, 2
        // Predicated region
        $region115: #{kron_linear_forward.1} parent=113 // pred_check
          %p1127 = pneg %p157
        $region116: #{kron_linear_forward.1} parent=113 // pred_check_branch
          %1129 = sbr.rel (%p1127) target = $region118
        $region117: #{kron_linear_forward.1} parent=113 // pred_region
          %s1130 = sand.u32 %s142, 1
          %s1131 = scalar_lea.sflag [#allocation5], %s1130
          %s1132 = sand.u32 %s142, 1
          %s1133 = smul.addr %s1132, 48
          %s1134 = scalar_lea.vmem [#allocation4], %s1133
          %1135 = dma.done %s1131, 768
        $region118: #{kron_linear_forward.1} parent=113 // pred_fallthru
          _
      $region114: #{kron_linear_forward.1} parent=5 // pred_fallthru
        _
    $region6: #{kron_linear_forward.1} parent=1 // loop_footer
      %s17 = sadd.s32 1, %s13
    $region7: #{kron_linear_forward.1} parent=1 // loop_footer_branch
      %12 = sbr.rel target = $region3
    $region8: #{kron_linear_forward.1} parent=1 // loop_exit
      _
    %1136 = vsyncpa [#allocation5], 1
    %s1137 = scalar_lea.sflag [#allocation5], 1
    %1138 = vsyncpa %s1137, 1

</llo_original>
